<compile_context>
chip_gen: v6e
topology: v6e:2x2x1
jax: 0.10.0
libtpu: 0.0.40
codegen_flags: <defaults>
</compile_context>

<pallas_src>
import math

import jax
import jax.numpy as jnp
from jax.experimental import pallas as pl
from jax.experimental.pallas import tpu as pltpu

HIDDEN = 264          # matches nn.Linear(input_size, 264) / nn.Linear(264, 264)
LANE = 128
HIDDEN_PAD = 384      # round_up(264, 128)


def _round_up(n, m):
    return ((n + m - 1) // m) * m


# ---------------------------------------------------------------------------
# Kernel: fused 3-layer MLP on one (batch-tile, ...) block.  Weights/biases are
# full (pre-packed, padded) blocks resident in VMEM.
# ---------------------------------------------------------------------------
def _mlp_kernel(x_ref, w1_ref, b1_ref, w2_ref, b2_ref, w3_ref, b3_ref, o_ref):
    w1 = w1_ref[...]                      # (D_in, 384)  f32 or bf16
    w2 = w2_ref[...]                      # (384, 384)
    w3 = w3_ref[...]                      # (384, A_pad)
    mxu_dtype = w1.dtype

    x = x_ref[...].astype(mxu_dtype)      # (Bt, D_in)

    # fc1 + ReLU  (f32 accumulate, f32 bias add)
    h1 = jnp.dot(x, w1, preferred_element_type=jnp.float32) + b1_ref[...]
    h1 = jnp.maximum(h1, 0.0)

    # fc2 + ReLU
    h2 = jnp.dot(h1.astype(mxu_dtype), w2, preferred_element_type=jnp.float32) + b2_ref[...]
    h2 = jnp.maximum(h2, 0.0)

    # fc3 (no activation)
    out = jnp.dot(h2.astype(mxu_dtype), w3, preferred_element_type=jnp.float32) + b3_ref[...]
    o_ref[...] = out.astype(o_ref.dtype)


# ---------------------------------------------------------------------------
# One-time parameter packing (outside the per-call hot path).
# PyTorch layout (out, in) -> (in, out), hidden padded to 384, actions padded
# to a multiple of 128, biases as (1, out_pad) f32.
# ---------------------------------------------------------------------------
def prepare_params(params, *, mxu_dtype=jnp.float32):
    w1, b1 = params["w1"], params["b1"]   # (264, D_in), (264,)
    w2, b2 = params["w2"], params["b2"]   # (264, 264),  (264,)
    w3, b3 = params["w3"], params["b3"]   # (A, 264),    (A,)

    d_in = w1.shape[1]
    num_action = w3.shape[0]
    a_pad = _round_up(num_action, LANE)

    w1t = jnp.asarray(w1, jnp.float32).T                      # (D_in, 264)
    w1p = jnp.pad(w1t, ((0, 0), (0, HIDDEN_PAD - HIDDEN)))    # (D_in, 384)

    w2t = jnp.asarray(w2, jnp.float32).T                      # (264, 264)
    w2p = jnp.pad(w2t, ((0, HIDDEN_PAD - HIDDEN), (0, HIDDEN_PAD - HIDDEN)))  # (384, 384)

    w3t = jnp.asarray(w3, jnp.float32).T                      # (264, A)
    w3p = jnp.pad(w3t, ((0, HIDDEN_PAD - HIDDEN), (0, a_pad - num_action)))   # (384, A_pad)

    b1p = jnp.pad(jnp.asarray(b1, jnp.float32), (0, HIDDEN_PAD - HIDDEN)).reshape(1, HIDDEN_PAD)
    b2p = jnp.pad(jnp.asarray(b2, jnp.float32), (0, HIDDEN_PAD - HIDDEN)).reshape(1, HIDDEN_PAD)
    b3p = jnp.pad(jnp.asarray(b3, jnp.float32), (0, a_pad - num_action)).reshape(1, a_pad)

    return {
        "w1": w1p.astype(mxu_dtype), "b1": b1p,
        "w2": w2p.astype(mxu_dtype), "b2": b2p,
        "w3": w3p.astype(mxu_dtype), "b3": b3p,
        "d_in": d_in, "num_action": num_action, "a_pad": a_pad,
    }


# ---------------------------------------------------------------------------
# Forward: single fused pallas_call.  For large batches divisible by
# `batch_tile`, tile the batch with a parallel grid (weights stay resident via
# constant index_maps); otherwise run the whole batch as one VMEM block.
# ---------------------------------------------------------------------------
def network_forward(state, packed, *, batch_tile=256):
    state = jnp.asarray(state, jnp.float32)
    B, d_in = state.shape
    a_pad = packed["a_pad"]
    num_action = packed["num_action"]

    args = (state, packed["w1"], packed["b1"], packed["w2"], packed["b2"],
            packed["w3"], packed["b3"])

    if B > batch_tile and B % batch_tile == 0:
        in_specs = [
            pl.BlockSpec((batch_tile, d_in), lambda i: (i, 0)),
            pl.BlockSpec(packed["w1"].shape, lambda i: (0, 0)),
            pl.BlockSpec(packed["b1"].shape, lambda i: (0, 0)),
            pl.BlockSpec(packed["w2"].shape, lambda i: (0, 0)),
            pl.BlockSpec(packed["b2"].shape, lambda i: (0, 0)),
            pl.BlockSpec(packed["w3"].shape, lambda i: (0, 0)),
            pl.BlockSpec(packed["b3"].shape, lambda i: (0, 0)),
        ]
        out_padded = pl.pallas_call(
            _mlp_kernel,
            out_shape=jax.ShapeDtypeStruct((B, a_pad), jnp.float32),
            grid=(B // batch_tile,),
            in_specs=in_specs,
            out_specs=pl.BlockSpec((batch_tile, a_pad), lambda i: (i, 0)),
            compiler_params=pltpu.CompilerParams(
                dimension_semantics=("parallel",)),
        )(*args)
    else:
        vmem = pl.BlockSpec(memory_space=pltpu.MemorySpace.VMEM)
        out_padded = pl.pallas_call(
            _mlp_kernel,
            out_shape=jax.ShapeDtypeStruct((B, a_pad), jnp.float32),
            in_specs=[vmem] * 7,
            out_specs=vmem,
        )(*args)

    # Padded action columns are exact zeros; slice once outside the kernel.
    return out_padded[:, :num_action]


# ---------------------------------------------------------------------------
# PyTorch-style init + pure-JAX reference
# ---------------------------------------------------------------------------
def init_params(key, input_size, num_action):
    """U(-1/sqrt(fan_in), 1/sqrt(fan_in)) for weight and bias (nn.Linear default)."""
    def linear_init(k, out_f, in_f):
        kw, kb = jax.random.split(k)
        bound = 1.0 / math.sqrt(in_f)
        w = jax.random.uniform(kw, (out_f, in_f), jnp.float32, -bound, bound)
        b = jax.random.uniform(kb, (out_f,), jnp.float32, -bound, bound)
        return w, b

    k1, k2, k3 = jax.random.split(key, 3)
    w1, b1 = linear_init(k1, HIDDEN, input_size)
    w2, b2 = linear_init(k2, HIDDEN, HIDDEN)
    w3, b3 = linear_init(k3, num_action, HIDDEN)
    return {"w1": w1, "b1": b1, "w2": w2, "b2": b2, "w3": w3, "b3": b3}


def reference_forward(state, params):
    h1 = jnp.maximum(state @ params["w1"].T + params["b1"], 0.0)
    h2 = jnp.maximum(h1 @ params["w2"].T + params["b2"], 0.0)
    return h2 @ params["w3"].T + params["b3"]


# TODO(synk): optim.Adam training step is not part of the forward pass and is not implemented.

if __name__ == "__main__":
    input_size = 16
    num_action = 4

    key = jax.random.PRNGKey(0)
    k_params, k_state, k_state_big = jax.random.split(key, 3)

    params = init_params(k_params, input_size, num_action)

    # --- small-batch inference path (no grid), f32 MXU inputs ---------------
    packed_f32 = prepare_params(params, mxu_dtype=jnp.float32)
    state = jax.random.normal(k_state, (2, input_size), jnp.float32)

    out = jax.block_until_ready(network_forward(state, packed_f32))
    ref = reference_forward(state, params)
    assert out.shape == (2, num_action)
    assert jnp.allclose(out, ref, atol=1e-4, rtol=1e-4), "f32 small-batch mismatch"

    # --- large-batch path (parallel batch grid, tile=256), f32 --------------
    state_big = jax.random.normal(k_state_big, (512, input_size), jnp.float32)
    out_big = jax.block_until_ready(network_forward(state_big, packed_f32, batch_tile=256))
    ref_big = reference_forward(state_big, params)
    assert out_big.shape == (512, num_action)
    assert jnp.allclose(out_big, ref_big, atol=1e-3, rtol=1e-3), "f32 gridded mismatch"

    # --- bf16 MXU inputs (v6e/v7x fast path), f32 accumulate ----------------
    packed_bf16 = prepare_params(params, mxu_dtype=jnp.bfloat16)
    out_bf16 = jax.block_until_ready(network_forward(state, packed_bf16))
    assert out_bf16.shape == (2, num_action)
    assert jnp.allclose(out_bf16, ref, atol=5e-2, rtol=5e-2), "bf16 mismatch"

    print("KERNEL_OK")
</pallas_src>

<mosaic_0001>
module attributes {stable_mosaic.version = 11 : i64} {
  func.func @_mlp_kernel(%arg0: memref<2x16xf32, #tpu.memory_space<vmem>>, %arg1: memref<16x384xf32, #tpu.memory_space<vmem>>, %arg2: memref<1x384xf32, #tpu.memory_space<vmem>>, %arg3: memref<384x384xf32, #tpu.memory_space<vmem>>, %arg4: memref<1x384xf32, #tpu.memory_space<vmem>>, %arg5: memref<384x128xf32, #tpu.memory_space<vmem>>, %arg6: memref<1x128xf32, #tpu.memory_space<vmem>>, %arg7: memref<2x128xf32, #tpu.memory_space<vmem>>) attributes {dimension_semantics = [], scalar_prefetch = 0 : i64, scratch_operands = 0 : i64, tpu.core_type = #tpu.core_type<tc>} {
    %c0 = arith.constant 0 : index
    %c0_0 = arith.constant 0 : index
    %0 = vector.load %arg1[%c0, %c0_0] : memref<16x384xf32, #tpu.memory_space<vmem>>, vector<16x384xf32>
    %c0_1 = arith.constant 0 : index
    %c0_2 = arith.constant 0 : index
    %1 = vector.load %arg3[%c0_1, %c0_2] : memref<384x384xf32, #tpu.memory_space<vmem>>, vector<384x384xf32>
    %c0_3 = arith.constant 0 : index
    %c0_4 = arith.constant 0 : index
    %2 = vector.load %arg5[%c0_3, %c0_4] : memref<384x128xf32, #tpu.memory_space<vmem>>, vector<384x128xf32>
    %c0_5 = arith.constant 0 : index
    %c0_6 = arith.constant 0 : index
    %3 = vector.load %arg0[%c0_5, %c0_6] : memref<2x16xf32, #tpu.memory_space<vmem>>, vector<2x16xf32>
    %cst = arith.constant dense<0.000000e+00> : vector<2x384xf32>
    %4 = tpu.matmul %3, %0, %cst {dimension_numbers = #tpu.dot_dimension_numbers<[1], [0], [0], [1], [0, 0, 1, 1], [], []>} : vector<2x16xf32>, vector<16x384xf32>, vector<2x384xf32> -> vector<2x384xf32>
    %c0_7 = arith.constant 0 : index
    %c0_8 = arith.constant 0 : index
    %5 = vector.load %arg2[%c0_7, %c0_8] : memref<1x384xf32, #tpu.memory_space<vmem>>, vector<1x384xf32>
    %6 = vector.broadcast %5 : vector<1x384xf32> to vector<2x384xf32>
    %7 = arith.addf %4, %6 : vector<2x384xf32>
    %cst_9 = arith.constant 0.000000e+00 : f32
    %8 = vector.broadcast %cst_9 : f32 to vector<2x384xf32>
    %9 = arith.maximumf %7, %8 : vector<2x384xf32>
    %cst_10 = arith.constant dense<0.000000e+00> : vector<2x384xf32>
    %10 = tpu.matmul %9, %1, %cst_10 {dimension_numbers = #tpu.dot_dimension_numbers<[1], [0], [0], [1], [0, 0, 1, 1], [], []>} : vector<2x384xf32>, vector<384x384xf32>, vector<2x384xf32> -> vector<2x384xf32>
    %c0_11 = arith.constant 0 : index
    %c0_12 = arith.constant 0 : index
    %11 = vector.load %arg4[%c0_11, %c0_12] : memref<1x384xf32, #tpu.memory_space<vmem>>, vector<1x384xf32>
    %12 = vector.broadcast %11 : vector<1x384xf32> to vector<2x384xf32>
    %13 = arith.addf %10, %12 : vector<2x384xf32>
    %cst_13 = arith.constant 0.000000e+00 : f32
    %14 = vector.broadcast %cst_13 : f32 to vector<2x384xf32>
    %15 = arith.maximumf %13, %14 : vector<2x384xf32>
    %cst_14 = arith.constant dense<0.000000e+00> : vector<2x128xf32>
    %16 = tpu.matmul %15, %2, %cst_14 {dimension_numbers = #tpu.dot_dimension_numbers<[1], [0], [0], [1], [0, 0, 1, 1], [], []>} : vector<2x384xf32>, vector<384x128xf32>, vector<2x128xf32> -> vector<2x128xf32>
    %c0_15 = arith.constant 0 : index
    %c0_16 = arith.constant 0 : index
    %17 = vector.load %arg6[%c0_15, %c0_16] : memref<1x128xf32, #tpu.memory_space<vmem>>, vector<1x128xf32>
    %18 = vector.broadcast %17 : vector<1x128xf32> to vector<2x128xf32>
    %19 = arith.addf %16, %18 : vector<2x128xf32>
    %c0_17 = arith.constant 0 : index
    %c0_18 = arith.constant 0 : index
    %20 = vector.load %arg7[%c0_17, %c0_18] : memref<2x128xf32, #tpu.memory_space<vmem>>, vector<2x128xf32>
    tpu.vector_store %arg7[%c0_17, %c0_18], %19 {strides = array<i32>} : memref<2x128xf32, #tpu.memory_space<vmem>>, vector<2x128xf32>,
    return
  }
}

</mosaic_0001>

<llo_original>
// kernel: tpu_custom_call.1
$region0: #{tpu_custom_call.1}
  #allocation0 [shape = 'u32[]', space=smem, size = 0x4, offset = 0x4, fixed_abs, tag = 'smem constant byte address 0x4 - core index']
  #allocation1 [shape = 'u32[144,128]{1,0:T(1,128)}', space=vmem, size = 0x12000, scoped, tag = 'internal scratch']
  %s0 = inlined_call_operand.hbm [shape: f32[2,16], index: 0, kind: input, shape index: {}]
  %s1 = inlined_call_operand.hbm [shape: f32[16,384], index: 1, kind: input, shape index: {}]
  %s2 = inlined_call_operand.vmem [shape: f32[1,384], index: 2, kind: input, shape index: {}]
  %s3 = inlined_call_operand.hbm [shape: f32[384,384], index: 3, kind: input, shape index: {}]
  %s4 = inlined_call_operand.vmem [shape: f32[1,384], index: 4, kind: input, shape index: {}]
  %s5 = inlined_call_operand.hbm [shape: f32[384,128], index: 5, kind: input, shape index: {}]
  %s6 = inlined_call_operand.vmem [shape: f32[1,128], index: 6, kind: input, shape index: {}]
  %s7 = inlined_call_operand.hbm [shape: f32[2,128], index: 7, kind: output, shape index: {}]
  %s8 = sld [smem:[#allocation0]]
  $region54: #{tpu_custom_call.1} parent=0
    _
  %s10 = ssub.s32 1, %s8
  %s11 = scalar_select 0, %s10, %s8
  $region1: #{tpu_custom_call.1} parent=0
    #allocation2 [shape = 'u8[1024]{0}', space=vmem, size = 0x400, scoped, tag = 'input window, operand 0, single buffered']
    #allocation3 [shape = 's32[1]{0}', space=sflag, size = 0x4, scoped, tag = 'scoped memory for tpu_custom_call.1']
    #allocation4 [shape = 's32[1]{0}', space=sflag, size = 0x4, scoped, tag = 'scoped memory for tpu_custom_call.1']
    #allocation5 [shape = 'u8[24576]{0}', space=vmem, size = 0x6000, scoped, tag = 'input window, operand 1, single buffered']
    #allocation6 [shape = 's32[1]{0}', space=sflag, size = 0x4, scoped, tag = 'scoped memory for tpu_custom_call.1']
    #allocation7 [shape = 'u8[589824]{0}', space=vmem, size = 0x90000, scoped, tag = 'input window, operand 3, single buffered']
    #allocation8 [shape = 'u8[196608]{0}', space=vmem, size = 0x30000, scoped, tag = 'input window, operand 5, single buffered']
    #allocation9 [shape = 's32[1]{0}', space=sflag, size = 0x4, scoped, tag = 'scoped memory for tpu_custom_call.1']
    #allocation10 [shape = 'u8[1024]{0}', space=vmem, size = 0x400, scoped, tag = 'output window, operand 0, single buffered']
    %12 = vsyncpa [#allocation3], 0
    %13 = vsyncpa [#allocation6], 0
    %14 = vsyncpa [#allocation9], 0
    %15 = vsyncpa [#allocation4], 0
    // Predicated region
    $region2: #{tpu_custom_call.1} parent=1 // pred_check
      _
    $region3: #{tpu_custom_call.1} parent=1 // pred_check_branch
      %17 = sbr.rel (0) target = $region5
    $region4: #{tpu_custom_call.1} parent=1 // pred_region
      %s19 = ssub.s32 32, 32
      %20 = vsyncadd [#allocation3], %s19
      %s22 = sshll.u32 [#allocation2], 4
      %s23 = int_to_ptr.vmem [resolvable:$true] %s22
      %25 = dma.hbm_to_vmem [thread:$0]  %s0, 32, %s23, [#allocation3]
    $region5: #{tpu_custom_call.1} parent=1 // pred_fallthru
      _
    // Predicated region
    $region6: #{tpu_custom_call.1} parent=1 // pred_check
      _
    $region7: #{tpu_custom_call.1} parent=1 // pred_check_branch
      %27 = sbr.rel (0) target = $region9
    $region8: #{tpu_custom_call.1} parent=1 // pred_region
      %s29 = ssub.s32 768, 768
      %30 = vsyncadd [#allocation6], %s29
      %s31 = sshll.u32 [#allocation5], 4
      %s32 = int_to_ptr.vmem [resolvable:$true] %s31
      %37 = dma.hbm_to_vmem [thread:$0]  %s1, 768, %s32, [#allocation6], 384, 384, 24
    $region9: #{tpu_custom_call.1} parent=1 // pred_fallthru
      _
    // Predicated region
    $region10: #{tpu_custom_call.1} parent=1 // pred_check
      _
    $region11: #{tpu_custom_call.1} parent=1 // pred_check_branch
      %39 = sbr.rel (0) target = $region13
    $region12: #{tpu_custom_call.1} parent=1 // pred_region
      _
    $region13: #{tpu_custom_call.1} parent=1 // pred_fallthru
      _
    // Predicated region
    $region14: #{tpu_custom_call.1} parent=1 // pred_check
      _
    $region15: #{tpu_custom_call.1} parent=1 // pred_check_branch
      %41 = sbr.rel (0) target = $region17
    $region16: #{tpu_custom_call.1} parent=1 // pred_region
      %s43 = ssub.s32 18432, 18432
      %44 = vsyncadd [#allocation6], %s43
      %s45 = sshll.u32 [#allocation7], 4
      %s46 = int_to_ptr.vmem [resolvable:$true] %s45
      %51 = dma.hbm_to_vmem [thread:$0]  %s3, 18432, %s46, [#allocation6], 384, 384, 24
    $region17: #{tpu_custom_call.1} parent=1 // pred_fallthru
      _
    // Predicated region
    $region18: #{tpu_custom_call.1} parent=1 // pred_check
      _
    $region19: #{tpu_custom_call.1} parent=1 // pred_check_branch
      %53 = sbr.rel (0) target = $region21
    $region20: #{tpu_custom_call.1} parent=1 // pred_region
      _
    $region21: #{tpu_custom_call.1} parent=1 // pred_fallthru
      _
    // Predicated region
    $region22: #{tpu_custom_call.1} parent=1 // pred_check
      _
    $region23: #{tpu_custom_call.1} parent=1 // pred_check_branch
      %55 = sbr.rel (0) target = $region25
    $region24: #{tpu_custom_call.1} parent=1 // pred_region
      %s57 = ssub.s32 6144, 6144
      %58 = vsyncadd [#allocation9], %s57
      %s59 = sshll.u32 [#allocation8], 4
      %s60 = int_to_ptr.vmem [resolvable:$true] %s59
      %65 = dma.hbm_to_vmem [thread:$0]  %s5, 6144, %s60, [#allocation9], 128, 128, 8
    $region25: #{tpu_custom_call.1} parent=1 // pred_fallthru
      _
    // Predicated region
    $region26: #{tpu_custom_call.1} parent=1 // pred_check
      _
    $region27: #{tpu_custom_call.1} parent=1 // pred_check_branch
      %67 = sbr.rel (0) target = $region29
    $region28: #{tpu_custom_call.1} parent=1 // pred_region
      _
    $region29: #{tpu_custom_call.1} parent=1 // pred_fallthru
      _
    // Predicated region
    $region30: #{tpu_custom_call.1} parent=1 // pred_check
      _
    $region31: #{tpu_custom_call.1} parent=1 // pred_check_branch
      %69 = sbr.rel (0) target = $region33
    $region32: #{tpu_custom_call.1} parent=1 // pred_region
      %70 = dma.done [#allocation3], 32
    $region33: #{tpu_custom_call.1} parent=1 // pred_fallthru
      _
    // Predicated region
    $region34: #{tpu_custom_call.1} parent=1 // pred_check
      _
    $region35: #{tpu_custom_call.1} parent=1 // pred_check_branch
      %72 = sbr.rel (0) target = $region37
    $region36: #{tpu_custom_call.1} parent=1 // pred_region
      %73 = dma.done [#allocation6], 768
    $region37: #{tpu_custom_call.1} parent=1 // pred_fallthru
      _
    // Predicated region
    $region38: #{tpu_custom_call.1} parent=1 // pred_check
      _
    $region39: #{tpu_custom_call.1} parent=1 // pred_check_branch
      %75 = sbr.rel (0) target = $region41
    $region40: #{tpu_custom_call.1} parent=1 // pred_region
      %76 = dma.done [#allocation6], 18432
    $region41: #{tpu_custom_call.1} parent=1 // pred_fallthru
      _
    // Predicated region
    $region42: #{tpu_custom_call.1} parent=1 // pred_check
      _
    $region43: #{tpu_custom_call.1} parent=1 // pred_check_branch
      %78 = sbr.rel (0) target = $region45
    $region44: #{tpu_custom_call.1} parent=1 // pred_region
      %79 = dma.done [#allocation9], 6144
    $region45: #{tpu_custom_call.1} parent=1 // pred_fallthru
      _
    %v80 = vld [vmem:[#allocation5] sm:$0xff]
    %v81 = vld [vmem:[#allocation5 + $0x8] sm:$0xff]
    %v82 = vld [vmem:[#allocation5 + $0x10] sm:$0xff]
    %v83 = vld [vmem:[#allocation5 + $0x18] sm:$0xff]
    %v84 = vld [vmem:[#allocation5 + $0x20] sm:$0xff]
    %v85 = vld [vmem:[#allocation5 + $0x28] sm:$0xff]
    %v86 = vld [vmem:[#allocation7] sm:$0xff]
    %v87 = vld [vmem:[#allocation7 + $0x8] sm:$0xff]
    %v88 = vld [vmem:[#allocation7 + $0x10] sm:$0xff]
    %v89 = vld [vmem:[#allocation7 + $0x18] sm:$0xff]
    %v90 = vld [vmem:[#allocation7 + $0x20] sm:$0xff]
    %v91 = vld [vmem:[#allocation7 + $0x28] sm:$0xff]
    %v92 = vld [vmem:[#allocation7 + $0x30] sm:$0xff]
    %v93 = vld [vmem:[#allocation7 + $0x38] sm:$0xff]
    %v94 = vld [vmem:[#allocation7 + $0x40] sm:$0xff]
    %v95 = vld [vmem:[#allocation7 + $0x48] sm:$0xff]
    %v96 = vld [vmem:[#allocation7 + $0x50] sm:$0xff]
    %v97 = vld [vmem:[#allocation7 + $0x58] sm:$0xff]
    %v98 = vld [vmem:[#allocation7 + $0x60] sm:$0xff]
    %v99 = vld [vmem:[#allocation7 + $0x68] sm:$0xff]
    %v100 = vld [vmem:[#allocation7 + $0x70] sm:$0xff]
    %v101 = vld [vmem:[#allocation7 + $0x78] sm:$0xff]
    %v102 = vld [vmem:[#allocation7 + $0x80] sm:$0xff]
    %v103 = vld [vmem:[#allocation7 + $0x88] sm:$0xff]
    %v104 = vld [vmem:[#allocation7 + $0x90] sm:$0xff]
    %v105 = vld [vmem:[#allocation7 + $0x98] sm:$0xff]
    %v106 = vld [vmem:[#allocation7 + $0xa0] sm:$0xff]
    %v107 = vld [vmem:[#allocation7 + $0xa8] sm:$0xff]
    %v108 = vld [vmem:[#allocation7 + $0xb0] sm:$0xff]
    %v109 = vld [vmem:[#allocation7 + $0xb8] sm:$0xff]
    %v110 = vld [vmem:[#allocation7 + $0xc0] sm:$0xff]
    %v111 = vld [vmem:[#allocation7 + $0xc8] sm:$0xff]
    %v112 = vld [vmem:[#allocation7 + $0xd0] sm:$0xff]
    %v113 = vld [vmem:[#allocation7 + $0xd8] sm:$0xff]
    %v114 = vld [vmem:[#allocation7 + $0xe0] sm:$0xff]
    %v115 = vld [vmem:[#allocation7 + $0xe8] sm:$0xff]
    %v116 = vld [vmem:[#allocation7 + $0xf0] sm:$0xff]
    %v117 = vld [vmem:[#allocation7 + $0xf8] sm:$0xff]
    %v118 = vld [vmem:[#allocation7 + $0x100] sm:$0xff]
    %v119 = vld [vmem:[#allocation7 + $0x108] sm:$0xff]
    %v120 = vld [vmem:[#allocation7 + $0x110] sm:$0xff]
    %v121 = vld [vmem:[#allocation7 + $0x118] sm:$0xff]
    %v122 = vld [vmem:[#allocation7 + $0x120] sm:$0xff]
    %v123 = vld [vmem:[#allocation7 + $0x128] sm:$0xff]
    %v124 = vld [vmem:[#allocation7 + $0x130] sm:$0xff]
    %v125 = vld [vmem:[#allocation7 + $0x138] sm:$0xff]
    %v126 = vld [vmem:[#allocation7 + $0x140] sm:$0xff]
    %v127 = vld [vmem:[#allocation7 + $0x148] sm:$0xff]
    %v128 = vld [vmem:[#allocation7 + $0x150] sm:$0xff]
    %v129 = vld [vmem:[#allocation7 + $0x158] sm:$0xff]
    %v130 = vld [vmem:[#allocation7 + $0x160] sm:$0xff]
    %v131 = vld [vmem:[#allocation7 + $0x168] sm:$0xff]
    %v132 = vld [vmem:[#allocation7 + $0x170] sm:$0xff]
    %v133 = vld [vmem:[#allocation7 + $0x178] sm:$0xff]
    %v134 = vld [vmem:[#allocation7 + $0x180] sm:$0xff]
    %v135 = vld [vmem:[#allocation7 + $0x188] sm:$0xff]
    %v136 = vld [vmem:[#allocation7 + $0x190] sm:$0xff]
    %v137 = vld [vmem:[#allocation7 + $0x198] sm:$0xff]
    %v138 = vld [vmem:[#allocation7 + $0x1a0] sm:$0xff]
    %v139 = vld [vmem:[#allocation7 + $0x1a8] sm:$0xff]
    %v140 = vld [vmem:[#allocation7 + $0x1b0] sm:$0xff]
    %v141 = vld [vmem:[#allocation7 + $0x1b8] sm:$0xff]
    %v142 = vld [vmem:[#allocation7 + $0x1c0] sm:$0xff]
    %v143 = vld [vmem:[#allocation7 + $0x1c8] sm:$0xff]
    %v144 = vld [vmem:[#allocation7 + $0x1d0] sm:$0xff]
    %v145 = vld [vmem:[#allocation7 + $0x1d8] sm:$0xff]
    %v146 = vld [vmem:[#allocation7 + $0x1e0] sm:$0xff]
    %v147 = vld [vmem:[#allocation7 + $0x1e8] sm:$0xff]
    %v148 = vld [vmem:[#allocation7 + $0x1f0] sm:$0xff]
    %v149 = vld [vmem:[#allocation7 + $0x1f8] sm:$0xff]
    %v150 = vld [vmem:[#allocation7 + $0x200] sm:$0xff]
    %v151 = vld [vmem:[#allocation7 + $0x208] sm:$0xff]
    %v152 = vld [vmem:[#allocation7 + $0x210] sm:$0xff]
    %v153 = vld [vmem:[#allocation7 + $0x218] sm:$0xff]
    %v154 = vld [vmem:[#allocation7 + $0x220] sm:$0xff]
    %v155 = vld [vmem:[#allocation7 + $0x228] sm:$0xff]
    %v156 = vld [vmem:[#allocation7 + $0x230] sm:$0xff]
    %v157 = vld [vmem:[#allocation7 + $0x238] sm:$0xff]
    %v158 = vld [vmem:[#allocation7 + $0x240] sm:$0xff]
    %v159 = vld [vmem:[#allocation7 + $0x248] sm:$0xff]
    %v160 = vld [vmem:[#allocation7 + $0x250] sm:$0xff]
    %v161 = vld [vmem:[#allocation7 + $0x258] sm:$0xff]
    %v162 = vld [vmem:[#allocation7 + $0x260] sm:$0xff]
    %v163 = vld [vmem:[#allocation7 + $0x268] sm:$0xff]
    %v164 = vld [vmem:[#allocation7 + $0x270] sm:$0xff]
    %v165 = vld [vmem:[#allocation7 + $0x278] sm:$0xff]
    %v166 = vld [vmem:[#allocation7 + $0x280] sm:$0xff]
    %v167 = vld [vmem:[#allocation7 + $0x288] sm:$0xff]
    %v168 = vld [vmem:[#allocation7 + $0x290] sm:$0xff]
    %v169 = vld [vmem:[#allocation7 + $0x298] sm:$0xff]
    %v170 = vld [vmem:[#allocation7 + $0x2a0] sm:$0xff]
    %v171 = vld [vmem:[#allocation7 + $0x2a8] sm:$0xff]
    %v172 = vld [vmem:[#allocation7 + $0x2b0] sm:$0xff]
    %v173 = vld [vmem:[#allocation7 + $0x2b8] sm:$0xff]
    %v174 = vld [vmem:[#allocation7 + $0x2c0] sm:$0xff]
    %v175 = vld [vmem:[#allocation7 + $0x2c8] sm:$0xff]
    %v176 = vld [vmem:[#allocation7 + $0x2d0] sm:$0xff]
    %v177 = vld [vmem:[#allocation7 + $0x2d8] sm:$0xff]
    %v178 = vld [vmem:[#allocation7 + $0x2e0] sm:$0xff]
    %v179 = vld [vmem:[#allocation7 + $0x2e8] sm:$0xff]
    %v180 = vld [vmem:[#allocation7 + $0x2f0] sm:$0xff]
    %v181 = vld [vmem:[#allocation7 + $0x2f8] sm:$0xff]
    %v182 = vld [vmem:[#allocation7 + $0x300] sm:$0xff]
    %v183 = vld [vmem:[#allocation7 + $0x308] sm:$0xff]
    %v184 = vld [vmem:[#allocation7 + $0x310] sm:$0xff]
    %v185 = vld [vmem:[#allocation7 + $0x318] sm:$0xff]
    %v186 = vld [vmem:[#allocation7 + $0x320] sm:$0xff]
    %v187 = vld [vmem:[#allocation7 + $0x328] sm:$0xff]
    %v188 = vld [vmem:[#allocation7 + $0x330] sm:$0xff]
    %v189 = vld [vmem:[#allocation7 + $0x338] sm:$0xff]
    %v190 = vld [vmem:[#allocation7 + $0x340] sm:$0xff]
    %v191 = vld [vmem:[#allocation7 + $0x348] sm:$0xff]
    %v192 = vld [vmem:[#allocation7 + $0x350] sm:$0xff]
    %v193 = vld [vmem:[#allocation7 + $0x358] sm:$0xff]
    %v194 = vld [vmem:[#allocation7 + $0x360] sm:$0xff]
    %v195 = vld [vmem:[#allocation7 + $0x368] sm:$0xff]
    %v196 = vld [vmem:[#allocation7 + $0x370] sm:$0xff]
    %v197 = vld [vmem:[#allocation7 + $0x378] sm:$0xff]
    %v198 = vld [vmem:[#allocation7 + $0x380] sm:$0xff]
    %v199 = vld [vmem:[#allocation7 + $0x388] sm:$0xff]
    %v200 = vld [vmem:[#allocation7 + $0x390] sm:$0xff]
    %v201 = vld [vmem:[#allocation7 + $0x398] sm:$0xff]
    %v202 = vld [vmem:[#allocation7 + $0x3a0] sm:$0xff]
    %v203 = vld [vmem:[#allocation7 + $0x3a8] sm:$0xff]
    %v204 = vld [vmem:[#allocation7 + $0x3b0] sm:$0xff]
    %v205 = vld [vmem:[#allocation7 + $0x3b8] sm:$0xff]
    %v206 = vld [vmem:[#allocation7 + $0x3c0] sm:$0xff]
    %v207 = vld [vmem:[#allocation7 + $0x3c8] sm:$0xff]
    %v208 = vld [vmem:[#allocation7 + $0x3d0] sm:$0xff]
    %v209 = vld [vmem:[#allocation7 + $0x3d8] sm:$0xff]
    %v210 = vld [vmem:[#allocation7 + $0x3e0] sm:$0xff]
    %v211 = vld [vmem:[#allocation7 + $0x3e8] sm:$0xff]
    %v212 = vld [vmem:[#allocation7 + $0x3f0] sm:$0xff]
    %v213 = vld [vmem:[#allocation7 + $0x3f8] sm:$0xff]
    %v214 = vld [vmem:[#allocation7 + $0x400] sm:$0xff]
    %v215 = vld [vmem:[#allocation7 + $0x408] sm:$0xff]
    %v216 = vld [vmem:[#allocation7 + $0x410] sm:$0xff]
    %v217 = vld [vmem:[#allocation7 + $0x418] sm:$0xff]
    %v218 = vld [vmem:[#allocation7 + $0x420] sm:$0xff]
    %v219 = vld [vmem:[#allocation7 + $0x428] sm:$0xff]
    %v220 = vld [vmem:[#allocation7 + $0x430] sm:$0xff]
    %v221 = vld [vmem:[#allocation7 + $0x438] sm:$0xff]
    %v222 = vld [vmem:[#allocation7 + $0x440] sm:$0xff]
    %v223 = vld [vmem:[#allocation7 + $0x448] sm:$0xff]
    %v224 = vld [vmem:[#allocation7 + $0x450] sm:$0xff]
    %v225 = vld [vmem:[#allocation7 + $0x458] sm:$0xff]
    %v226 = vld [vmem:[#allocation7 + $0x460] sm:$0xff]
    %v227 = vld [vmem:[#allocation7 + $0x468] sm:$0xff]
    %v228 = vld [vmem:[#allocation7 + $0x470] sm:$0xff]
    %v229 = vld [vmem:[#allocation7 + $0x478] sm:$0xff]
    %v230 = vld [vmem:[#allocation8] sm:$0xff]
    %v231 = vld [vmem:[#allocation8 + $0x8] sm:$0xff]
    %v232 = vld [vmem:[#allocation8 + $0x10] sm:$0xff]
    %v233 = vld [vmem:[#allocation8 + $0x18] sm:$0xff]
    %v234 = vld [vmem:[#allocation8 + $0x20] sm:$0xff]
    %v235 = vld [vmem:[#allocation8 + $0x28] sm:$0xff]
    %v236 = vld [vmem:[#allocation8 + $0x30] sm:$0xff]
    %v237 = vld [vmem:[#allocation8 + $0x38] sm:$0xff]
    %v238 = vld [vmem:[#allocation8 + $0x40] sm:$0xff]
    %v239 = vld [vmem:[#allocation8 + $0x48] sm:$0xff]
    %v240 = vld [vmem:[#allocation8 + $0x50] sm:$0xff]
    %v241 = vld [vmem:[#allocation8 + $0x58] sm:$0xff]
    %v242 = vld [vmem:[#allocation8 + $0x60] sm:$0xff]
    %v243 = vld [vmem:[#allocation8 + $0x68] sm:$0xff]
    %v244 = vld [vmem:[#allocation8 + $0x70] sm:$0xff]
    %v245 = vld [vmem:[#allocation8 + $0x78] sm:$0xff]
    %v246 = vld [vmem:[#allocation8 + $0x80] sm:$0xff]
    %v247 = vld [vmem:[#allocation8 + $0x88] sm:$0xff]
    %v248 = vld [vmem:[#allocation8 + $0x90] sm:$0xff]
    %v249 = vld [vmem:[#allocation8 + $0x98] sm:$0xff]
    %v250 = vld [vmem:[#allocation8 + $0xa0] sm:$0xff]
    %v251 = vld [vmem:[#allocation8 + $0xa8] sm:$0xff]
    %v252 = vld [vmem:[#allocation8 + $0xb0] sm:$0xff]
    %v253 = vld [vmem:[#allocation8 + $0xb8] sm:$0xff]
    %v254 = vld [vmem:[#allocation8 + $0xc0] sm:$0xff]
    %v255 = vld [vmem:[#allocation8 + $0xc8] sm:$0xff]
    %v256 = vld [vmem:[#allocation8 + $0xd0] sm:$0xff]
    %v257 = vld [vmem:[#allocation8 + $0xd8] sm:$0xff]
    %v258 = vld [vmem:[#allocation8 + $0xe0] sm:$0xff]
    %v259 = vld [vmem:[#allocation8 + $0xe8] sm:$0xff]
    %v260 = vld [vmem:[#allocation8 + $0xf0] sm:$0xff]
    %v261 = vld [vmem:[#allocation8 + $0xf8] sm:$0xff]
    %v262 = vld [vmem:[#allocation8 + $0x100] sm:$0xff]
    %v263 = vld [vmem:[#allocation8 + $0x108] sm:$0xff]
    %v264 = vld [vmem:[#allocation8 + $0x110] sm:$0xff]
    %v265 = vld [vmem:[#allocation8 + $0x118] sm:$0xff]
    %v266 = vld [vmem:[#allocation8 + $0x120] sm:$0xff]
    %v267 = vld [vmem:[#allocation8 + $0x128] sm:$0xff]
    %v268 = vld [vmem:[#allocation8 + $0x130] sm:$0xff]
    %v269 = vld [vmem:[#allocation8 + $0x138] sm:$0xff]
    %v270 = vld [vmem:[#allocation8 + $0x140] sm:$0xff]
    %v271 = vld [vmem:[#allocation8 + $0x148] sm:$0xff]
    %v272 = vld [vmem:[#allocation8 + $0x150] sm:$0xff]
    %v273 = vld [vmem:[#allocation8 + $0x158] sm:$0xff]
    %v274 = vld [vmem:[#allocation8 + $0x160] sm:$0xff]
    %v275 = vld [vmem:[#allocation8 + $0x168] sm:$0xff]
    %v276 = vld [vmem:[#allocation8 + $0x170] sm:$0xff]
    %v277 = vld [vmem:[#allocation8 + $0x178] sm:$0xff]
    %v278 = vld [vmem:[#allocation2] sm:$0x3]
    %v279 = vld [vmem:[%s2] sm:$0x7]
    %v281 = vlaneseq
    %v282 = vshrl.u32 %v281, 7
    %v283 = vsub.s32 0, %v282
    %v284 = vrot.slane %v279, %v283
    %v285 = vlaneseq
    %v286 = vshrl.u32 %v285, 7
    %v287 = vsub.s32 1, %v286
    %v288 = vrot.slane %v279, %v287
    %v289 = vlaneseq
    %v290 = vshrl.u32 %v289, 7
    %v291 = vsub.s32 2, %v290
    %v292 = vrot.slane %v279, %v291
    %vm296 = vcmask 130048
    %v298 = vsel %vm296, %v278, 0
    %300 = vmatprep.subr.mxu0 0.0
    %301 = vmatpush1.msra.mxu0 0.0
    %302 = vmatprep.subr.mxu0 0.0
    %303 = vmatpush1.msra.mxu0 0.0
    %304 = vmatprep.subr.mxu0 0.0
    %305 = vmatpush1.msra.mxu0 0.0
    %306 = vmatprep.subr.mxu0 0.0
    %307 = vmatpush1.msra.mxu0 0.0
    %308 = vmatprep.subr.mxu0 0.0
    %309 = vmatpush1.msra.mxu0 0.0
    %310 = vmatprep.subr.mxu0 0.0
    %311 = vmatpush1.msra.mxu0 0.0
    %312 = vmatprep.subr.mxu0 0.0
    %313 = vmatpush1.msra.mxu0 0.0
    %314 = vmatprep.subr.mxu0 0.0
    %315 = vmatpush1.msra.mxu0 0.0
    %316 = vmatprep.subr.mxu0 0.0
    %317 = vmatpush1.msra.mxu0 0.0
    %318 = vmatprep.subr.mxu0 0.0
    %319 = vmatpush1.msra.mxu0 0.0
    %320 = vmatprep.subr.mxu0 0.0
    %321 = vmatpush1.msra.mxu0 0.0
    %322 = vmatprep.subr.mxu0 0.0
    %323 = vmatpush1.msra.mxu0 0.0
    %324 = vmatprep.subr.mxu0 0.0
    %325 = vmatpush1.msra.mxu0 0.0
    %326 = vmatprep.subr.mxu0 0.0
    %327 = vmatpush1.msra.mxu0 0.0
    %328 = vmatprep.subr.mxu0 %v84
    %329 = vmatpush1.msra.mxu0 %v83
    %330 = vmatprep.subr.mxu0 %v81
    %331 = vmatpush1.msra.mxu0 %v80
    %332 = vmatprep.subr.mxu0 0.0
    %333 = vmatpush2.msra.mxu0 0.0
    %334 = vmatprep.subr.mxu0 0.0
    %335 = vmatpush2.msra.mxu0 0.0
    %336 = vmatprep.subr.mxu0 0.0
    %337 = vmatpush2.msra.mxu0 0.0
    %338 = vmatprep.subr.mxu0 0.0
    %339 = vmatpush2.msra.mxu0 0.0
    %340 = vmatprep.subr.mxu0 0.0
    %341 = vmatpush2.msra.mxu0 0.0
    %342 = vmatprep.subr.mxu0 0.0
    %343 = vmatpush2.msra.mxu0 0.0
    %344 = vmatprep.subr.mxu0 0.0
    %345 = vmatpush2.msra.mxu0 0.0
    %346 = vmatprep.subr.mxu0 0.0
    %347 = vmatpush2.msra.mxu0 0.0
    %348 = vmatprep.subr.mxu0 0.0
    %349 = vmatpush2.msra.mxu0 0.0
    %350 = vmatprep.subr.mxu0 0.0
    %351 = vmatpush2.msra.mxu0 0.0
    %352 = vmatprep.subr.mxu0 0.0
    %353 = vmatpush2.msra.mxu0 0.0
    %354 = vmatprep.subr.mxu0 0.0
    %355 = vmatpush2.msra.mxu0 0.0
    %356 = vmatprep.subr.mxu0 0.0
    %357 = vmatpush2.msra.mxu0 0.0
    %358 = vmatprep.subr.mxu0 0.0
    %359 = vmatpush2.msra.mxu0 0.0
    %360 = vmatprep.subr.mxu0 0.0
    %361 = vmatpush2.msra.mxu0 0.0
    %362 = vmatprep.subr.mxu0 0.0
    %363 = vmatpush2.msra.mxu0 0.0
    %364 = vmatprep.mubr.f32.mxu0 0.0
    %365 = vmatmul.mubr.f32.gmra.mxu0 %v298
    %v366 = vpop.f32.mrf.mxu0
    %v367 = vadd.f32 %v284, %v366
    %v368 = vpop.f32.mrf.mxu0
    %v369 = vadd.f32 %v288, %v368
    %370 = vdwg.mxu0
    %371 = vmatprep.subr.mxu0 0.0
    %372 = vmatpush1.msra.mxu0 0.0
    %373 = vmatprep.subr.mxu0 0.0
    %374 = vmatpush1.msra.mxu0 0.0
    %375 = vmatprep.subr.mxu0 0.0
    %376 = vmatpush1.msra.mxu0 0.0
    %377 = vmatprep.subr.mxu0 0.0
    %378 = vmatpush1.msra.mxu0 0.0
    %379 = vmatprep.subr.mxu0 0.0
    %380 = vmatpush1.msra.mxu0 0.0
    %381 = vmatprep.subr.mxu0 0.0
    %382 = vmatpush1.msra.mxu0 0.0
    %383 = vmatprep.subr.mxu0 0.0
    %384 = vmatpush1.msra.mxu0 0.0
    %385 = vmatprep.subr.mxu0 0.0
    %386 = vmatpush1.msra.mxu0 0.0
    %387 = vmatprep.subr.mxu0 0.0
    %388 = vmatpush1.msra.mxu0 0.0
    %389 = vmatprep.subr.mxu0 0.0
    %390 = vmatpush1.msra.mxu0 0.0
    %391 = vmatprep.subr.mxu0 0.0
    %392 = vmatpush1.msra.mxu0 0.0
    %393 = vmatprep.subr.mxu0 0.0
    %394 = vmatpush1.msra.mxu0 0.0
    %395 = vmatprep.subr.mxu0 0.0
    %396 = vmatpush1.msra.mxu0 0.0
    %397 = vmatprep.subr.mxu0 0.0
    %398 = vmatpush1.msra.mxu0 0.0
    %399 = vmatprep.subr.mxu0 0.0
    %400 = vmatpush1.msra.mxu0 %v85
    %401 = vmatprep.subr.mxu0 0.0
    %402 = vmatpush1.msra.mxu0 %v82
    %403 = vmatprep.subr.mxu0 0.0
    %404 = vmatpush2.msra.mxu0 0.0
    %405 = vmatprep.subr.mxu0 0.0
    %406 = vmatpush2.msra.mxu0 0.0
    %407 = vmatprep.subr.mxu0 0.0
    %408 = vmatpush2.msra.mxu0 0.0
    %409 = vmatprep.subr.mxu0 0.0
    %410 = vmatpush2.msra.mxu0 0.0
    %411 = vmatprep.subr.mxu0 0.0
    %412 = vmatpush2.msra.mxu0 0.0
    %413 = vmatprep.subr.mxu0 0.0
    %414 = vmatpush2.msra.mxu0 0.0
    %415 = vmatprep.subr.mxu0 0.0
    %416 = vmatpush2.msra.mxu0 0.0
    %417 = vmatprep.subr.mxu0 0.0
    %418 = vmatpush2.msra.mxu0 0.0
    %419 = vmatprep.subr.mxu0 0.0
    %420 = vmatpush2.msra.mxu0 0.0
    %421 = vmatprep.subr.mxu0 0.0
    %422 = vmatpush2.msra.mxu0 0.0
    %423 = vmatprep.subr.mxu0 0.0
    %424 = vmatpush2.msra.mxu0 0.0
    %425 = vmatprep.subr.mxu0 0.0
    %426 = vmatpush2.msra.mxu0 0.0
    %427 = vmatprep.subr.mxu0 0.0
    %428 = vmatpush2.msra.mxu0 0.0
    %429 = vmatprep.subr.mxu0 0.0
    %430 = vmatpush2.msra.mxu0 0.0
    %431 = vmatprep.subr.mxu0 0.0
    %432 = vmatpush2.msra.mxu0 0.0
    %433 = vmatprep.subr.mxu0 0.0
    %434 = vmatpush2.msra.mxu0 0.0
    %435 = vmatprep.mubr.f32.mxu0 0.0
    %436 = vmatmul.mubr.f32.gmra.mxu0 %v298
    %v437 = vpop.f32.mrf.mxu0
    %v438 = vadd.f32 %v292, %v437
    %v439 = vpop.f32.mrf.mxu0
    %440 = vdwg.mxu0
    %v441 = vmax.f32 %v367, 0.0
    %v442 = vmax.f32 %v369, 0.0
    %v443 = vmax.f32 %v438, 0.0
    %v444 = vld [vmem:[%s4] sm:$0x7]
    %v446 = vlaneseq
    %v447 = vshrl.u32 %v446, 7
    %v448 = vsub.s32 0, %v447
    %v449 = vrot.slane %v444, %v448
    %v450 = vlaneseq
    %v451 = vshrl.u32 %v450, 7
    %v452 = vsub.s32 1, %v451
    %v453 = vrot.slane %v444, %v452
    %v454 = vlaneseq
    %v455 = vshrl.u32 %v454, 7
    %v456 = vsub.s32 2, %v455
    %v457 = vrot.slane %v444, %v456
    %461 = vmatprep.subr.mxu0 %v132
    %462 = vmatpush1.msra.mxu0 %v131
    %463 = vmatprep.subr.mxu0 %v129
    %464 = vmatpush1.msra.mxu0 %v128
    %465 = vmatprep.subr.mxu0 %v126
    %466 = vmatpush1.msra.mxu0 %v125
    %467 = vmatprep.subr.mxu0 %v123
    %468 = vmatpush1.msra.mxu0 %v122
    %469 = vmatprep.subr.mxu0 %v120
    %470 = vmatpush1.msra.mxu0 %v119
    %471 = vmatprep.subr.mxu0 %v117
    %472 = vmatpush1.msra.mxu0 %v116
    %473 = vmatprep.subr.mxu0 %v114
    %474 = vmatpush1.msra.mxu0 %v113
    %475 = vmatprep.subr.mxu0 %v111
    %476 = vmatpush1.msra.mxu0 %v110
    %477 = vmatprep.subr.mxu0 %v108
    %478 = vmatpush1.msra.mxu0 %v107
    %479 = vmatprep.subr.mxu0 %v105
    %480 = vmatpush1.msra.mxu0 %v104
    %481 = vmatprep.subr.mxu0 %v102
    %482 = vmatpush1.msra.mxu0 %v101
    %483 = vmatprep.subr.mxu0 %v99
    %484 = vmatpush1.msra.mxu0 %v98
    %485 = vmatprep.subr.mxu0 %v96
    %486 = vmatpush1.msra.mxu0 %v95
    %487 = vmatprep.subr.mxu0 %v93
    %488 = vmatpush1.msra.mxu0 %v92
    %489 = vmatprep.subr.mxu0 %v90
    %490 = vmatpush1.msra.mxu0 %v89
    %491 = vmatprep.subr.mxu0 %v87
    %492 = vmatpush1.msra.mxu0 %v86
    %493 = vmatprep.subr.mxu0 %v180
    %494 = vmatpush2.msra.mxu0 %v179
    %495 = vmatprep.subr.mxu0 %v177
    %496 = vmatpush2.msra.mxu0 %v176
    %497 = vmatprep.subr.mxu0 %v174
    %498 = vmatpush2.msra.mxu0 %v173
    %499 = vmatprep.subr.mxu0 %v171
    %500 = vmatpush2.msra.mxu0 %v170
    %501 = vmatprep.subr.mxu0 %v168
    %502 = vmatpush2.msra.mxu0 %v167
    %503 = vmatprep.subr.mxu0 %v165
    %504 = vmatpush2.msra.mxu0 %v164
    %505 = vmatprep.subr.mxu0 %v162
    %506 = vmatpush2.msra.mxu0 %v161
    %507 = vmatprep.subr.mxu0 %v159
    %508 = vmatpush2.msra.mxu0 %v158
    %509 = vmatprep.subr.mxu0 %v156
    %510 = vmatpush2.msra.mxu0 %v155
    %511 = vmatprep.subr.mxu0 %v153
    %512 = vmatpush2.msra.mxu0 %v152
    %513 = vmatprep.subr.mxu0 %v150
    %514 = vmatpush2.msra.mxu0 %v149
    %515 = vmatprep.subr.mxu0 %v147
    %516 = vmatpush2.msra.mxu0 %v146
    %517 = vmatprep.subr.mxu0 %v144
    %518 = vmatpush2.msra.mxu0 %v143
    %519 = vmatprep.subr.mxu0 %v141
    %520 = vmatpush2.msra.mxu0 %v140
    %521 = vmatprep.subr.mxu0 %v138
    %522 = vmatpush2.msra.mxu0 %v137
    %523 = vmatprep.subr.mxu0 %v135
    %524 = vmatpush2.msra.mxu0 %v134
    %525 = vmatprep.mubr.f32.mxu0 %v442
    %526 = vmatmul.mubr.f32.gmra.mxu0 %v441
    %v527 = vpop.f32.mrf.mxu0
    %v528 = vadd.f32 %v449, %v527
    %v529 = vpop.f32.mrf.mxu0
    %v530 = vadd.f32 %v453, %v529
    %531 = vdwg.mxu0
    %532 = vmatprep.subr.mxu0 %v228
    %533 = vmatpush1.msra.mxu0 %v227
    %534 = vmatprep.subr.mxu0 %v225
    %535 = vmatpush1.msra.mxu0 %v224
    %536 = vmatprep.subr.mxu0 %v222
    %537 = vmatpush1.msra.mxu0 %v221
    %538 = vmatprep.subr.mxu0 %v219
    %539 = vmatpush1.msra.mxu0 %v218
    %540 = vmatprep.subr.mxu0 %v216
    %541 = vmatpush1.msra.mxu0 %v215
    %542 = vmatprep.subr.mxu0 %v213
    %543 = vmatpush1.msra.mxu0 %v212
    %544 = vmatprep.subr.mxu0 %v210
    %545 = vmatpush1.msra.mxu0 %v209
    %546 = vmatprep.subr.mxu0 %v207
    %547 = vmatpush1.msra.mxu0 %v206
    %548 = vmatprep.subr.mxu0 %v204
    %549 = vmatpush1.msra.mxu0 %v203
    %550 = vmatprep.subr.mxu0 %v201
    %551 = vmatpush1.msra.mxu0 %v200
    %552 = vmatprep.subr.mxu0 %v198
    %553 = vmatpush1.msra.mxu0 %v197
    %554 = vmatprep.subr.mxu0 %v195
    %555 = vmatpush1.msra.mxu0 %v194
    %556 = vmatprep.subr.mxu0 %v192
    %557 = vmatpush1.msra.mxu0 %v191
    %558 = vmatprep.subr.mxu0 %v189
    %559 = vmatpush1.msra.mxu0 %v188
    %560 = vmatprep.subr.mxu0 %v186
    %561 = vmatpush1.msra.mxu0 %v185
    %562 = vmatprep.subr.mxu0 %v183
    %563 = vmatpush1.msra.mxu0 %v182
    %564 = vmatprep.subr.mxu0 0.0
    %565 = vmatpush2.msra.mxu0 0.0
    %566 = vmatprep.subr.mxu0 0.0
    %567 = vmatpush2.msra.mxu0 0.0
    %568 = vmatprep.subr.mxu0 0.0
    %569 = vmatpush2.msra.mxu0 0.0
    %570 = vmatprep.subr.mxu0 0.0
    %571 = vmatpush2.msra.mxu0 0.0
    %572 = vmatprep.subr.mxu0 0.0
    %573 = vmatpush2.msra.mxu0 0.0
    %574 = vmatprep.subr.mxu0 0.0
    %575 = vmatpush2.msra.mxu0 0.0
    %576 = vmatprep.subr.mxu0 0.0
    %577 = vmatpush2.msra.mxu0 0.0
    %578 = vmatprep.subr.mxu0 0.0
    %579 = vmatpush2.msra.mxu0 0.0
    %580 = vmatprep.subr.mxu0 0.0
    %581 = vmatpush2.msra.mxu0 0.0
    %582 = vmatprep.subr.mxu0 0.0
    %583 = vmatpush2.msra.mxu0 0.0
    %584 = vmatprep.subr.mxu0 0.0
    %585 = vmatpush2.msra.mxu0 0.0
    %586 = vmatprep.subr.mxu0 0.0
    %587 = vmatpush2.msra.mxu0 0.0
    %588 = vmatprep.subr.mxu0 0.0
    %589 = vmatpush2.msra.mxu0 0.0
    %590 = vmatprep.subr.mxu0 0.0
    %591 = vmatpush2.msra.mxu0 0.0
    %592 = vmatprep.subr.mxu0 0.0
    %593 = vmatpush2.msra.mxu0 0.0
    %594 = vmatprep.subr.mxu0 0.0
    %595 = vmatpush2.msra.mxu0 0.0
    %596 = vmatprep.mubr.f32.mxu0 0.0
    %597 = vmatmul.mubr.f32.gmra.mxu0 %v443
    %v598 = vpop.f32.mrf.mxu0
    %v599 = vadd.f32 %v528, %v598
    %v600 = vpop.f32.mrf.mxu0
    %v601 = vadd.f32 %v530, %v600
    %602 = vdwg.mxu0
    %603 = vmatprep.subr.mxu0 0.0
    %604 = vmatpush1.msra.mxu0 %v133
    %605 = vmatprep.subr.mxu0 0.0
    %606 = vmatpush1.msra.mxu0 %v130
    %607 = vmatprep.subr.mxu0 0.0
    %608 = vmatpush1.msra.mxu0 %v127
    %609 = vmatprep.subr.mxu0 0.0
    %610 = vmatpush1.msra.mxu0 %v124
    %611 = vmatprep.subr.mxu0 0.0
    %612 = vmatpush1.msra.mxu0 %v121
    %613 = vmatprep.subr.mxu0 0.0
    %614 = vmatpush1.msra.mxu0 %v118
    %615 = vmatprep.subr.mxu0 0.0
    %616 = vmatpush1.msra.mxu0 %v115
    %617 = vmatprep.subr.mxu0 0.0
    %618 = vmatpush1.msra.mxu0 %v112
    %619 = vmatprep.subr.mxu0 0.0
    %620 = vmatpush1.msra.mxu0 %v109
    %621 = vmatprep.subr.mxu0 0.0
    %622 = vmatpush1.msra.mxu0 %v106
    %623 = vmatprep.subr.mxu0 0.0
    %624 = vmatpush1.msra.mxu0 %v103
    %625 = vmatprep.subr.mxu0 0.0
    %626 = vmatpush1.msra.mxu0 %v100
    %627 = vmatprep.subr.mxu0 0.0
    %628 = vmatpush1.msra.mxu0 %v97
    %629 = vmatprep.subr.mxu0 0.0
    %630 = vmatpush1.msra.mxu0 %v94
    %631 = vmatprep.subr.mxu0 0.0
    %632 = vmatpush1.msra.mxu0 %v91
    %633 = vmatprep.subr.mxu0 0.0
    %634 = vmatpush1.msra.mxu0 %v88
    %635 = vmatprep.subr.mxu0 0.0
    %636 = vmatpush2.msra.mxu0 %v181
    %637 = vmatprep.subr.mxu0 0.0
    %638 = vmatpush2.msra.mxu0 %v178
    %639 = vmatprep.subr.mxu0 0.0
    %640 = vmatpush2.msra.mxu0 %v175
    %641 = vmatprep.subr.mxu0 0.0
    %642 = vmatpush2.msra.mxu0 %v172
    %643 = vmatprep.subr.mxu0 0.0
    %644 = vmatpush2.msra.mxu0 %v169
    %645 = vmatprep.subr.mxu0 0.0
    %646 = vmatpush2.msra.mxu0 %v166
    %647 = vmatprep.subr.mxu0 0.0
    %648 = vmatpush2.msra.mxu0 %v163
    %649 = vmatprep.subr.mxu0 0.0
    %650 = vmatpush2.msra.mxu0 %v160
    %651 = vmatprep.subr.mxu0 0.0
    %652 = vmatpush2.msra.mxu0 %v157
    %653 = vmatprep.subr.mxu0 0.0
    %654 = vmatpush2.msra.mxu0 %v154
    %655 = vmatprep.subr.mxu0 0.0
    %656 = vmatpush2.msra.mxu0 %v151
    %657 = vmatprep.subr.mxu0 0.0
    %658 = vmatpush2.msra.mxu0 %v148
    %659 = vmatprep.subr.mxu0 0.0
    %660 = vmatpush2.msra.mxu0 %v145
    %661 = vmatprep.subr.mxu0 0.0
    %662 = vmatpush2.msra.mxu0 %v142
    %663 = vmatprep.subr.mxu0 0.0
    %664 = vmatpush2.msra.mxu0 %v139
    %665 = vmatprep.subr.mxu0 0.0
    %666 = vmatpush2.msra.mxu0 %v136
    %667 = vmatprep.mubr.f32.mxu0 %v442
    %668 = vmatmul.mubr.f32.gmra.mxu0 %v441
    %v669 = vpop.f32.mrf.mxu0
    %v670 = vadd.f32 %v457, %v669
    %v671 = vpop.f32.mrf.mxu0
    %672 = vdwg.mxu0
    %673 = vmatprep.subr.mxu0 0.0
    %674 = vmatpush1.msra.mxu0 %v229
    %675 = vmatprep.subr.mxu0 0.0
    %676 = vmatpush1.msra.mxu0 %v226
    %677 = vmatprep.subr.mxu0 0.0
    %678 = vmatpush1.msra.mxu0 %v223
    %679 = vmatprep.subr.mxu0 0.0
    %680 = vmatpush1.msra.mxu0 %v220
    %681 = vmatprep.subr.mxu0 0.0
    %682 = vmatpush1.msra.mxu0 %v217
    %683 = vmatprep.subr.mxu0 0.0
    %684 = vmatpush1.msra.mxu0 %v214
    %685 = vmatprep.subr.mxu0 0.0
    %686 = vmatpush1.msra.mxu0 %v211
    %687 = vmatprep.subr.mxu0 0.0
    %688 = vmatpush1.msra.mxu0 %v208
    %689 = vmatprep.subr.mxu0 0.0
    %690 = vmatpush1.msra.mxu0 %v205
    %691 = vmatprep.subr.mxu0 0.0
    %692 = vmatpush1.msra.mxu0 %v202
    %693 = vmatprep.subr.mxu0 0.0
    %694 = vmatpush1.msra.mxu0 %v199
    %695 = vmatprep.subr.mxu0 0.0
    %696 = vmatpush1.msra.mxu0 %v196
    %697 = vmatprep.subr.mxu0 0.0
    %698 = vmatpush1.msra.mxu0 %v193
    %699 = vmatprep.subr.mxu0 0.0
    %700 = vmatpush1.msra.mxu0 %v190
    %701 = vmatprep.subr.mxu0 0.0
    %702 = vmatpush1.msra.mxu0 %v187
    %703 = vmatprep.subr.mxu0 0.0
    %704 = vmatpush1.msra.mxu0 %v184
    %705 = vmatprep.subr.mxu0 0.0
    %706 = vmatpush2.msra.mxu0 0.0
    %707 = vmatprep.subr.mxu0 0.0
    %708 = vmatpush2.msra.mxu0 0.0
    %709 = vmatprep.subr.mxu0 0.0
    %710 = vmatpush2.msra.mxu0 0.0
    %711 = vmatprep.subr.mxu0 0.0
    %712 = vmatpush2.msra.mxu0 0.0
    %713 = vmatprep.subr.mxu0 0.0
    %714 = vmatpush2.msra.mxu0 0.0
    %715 = vmatprep.subr.mxu0 0.0
    %716 = vmatpush2.msra.mxu0 0.0
    %717 = vmatprep.subr.mxu0 0.0
    %718 = vmatpush2.msra.mxu0 0.0
    %719 = vmatprep.subr.mxu0 0.0
    %720 = vmatpush2.msra.mxu0 0.0
    %721 = vmatprep.subr.mxu0 0.0
    %722 = vmatpush2.msra.mxu0 0.0
    %723 = vmatprep.subr.mxu0 0.0
    %724 = vmatpush2.msra.mxu0 0.0
    %725 = vmatprep.subr.mxu0 0.0
    %726 = vmatpush2.msra.mxu0 0.0
    %727 = vmatprep.subr.mxu0 0.0
    %728 = vmatpush2.msra.mxu0 0.0
    %729 = vmatprep.subr.mxu0 0.0
    %730 = vmatpush2.msra.mxu0 0.0
    %731 = vmatprep.subr.mxu0 0.0
    %732 = vmatpush2.msra.mxu0 0.0
    %733 = vmatprep.subr.mxu0 0.0
    %734 = vmatpush2.msra.mxu0 0.0
    %735 = vmatprep.subr.mxu0 0.0
    %736 = vmatpush2.msra.mxu0 0.0
    %737 = vmatprep.mubr.f32.mxu0 0.0
    %738 = vmatmul.mubr.f32.gmra.mxu0 %v443
    %v739 = vpop.f32.mrf.mxu0
    %v740 = vadd.f32 %v670, %v739
    %v741 = vpop.f32.mrf.mxu0
    %742 = vdwg.mxu0
    %v743 = vmax.f32 %v599, 0.0
    %v744 = vmax.f32 %v601, 0.0
    %v745 = vmax.f32 %v740, 0.0
    %v746 = vld [vmem:[%s6] sm:$0x1]
    %v748 = vlaneseq
    %v749 = vshrl.u32 %v748, 7
    %v750 = vsub.s32 0, %v749
    %v751 = vrot.slane %v746, %v750
    %753 = vmatprep.subr.mxu0 0.0
    %754 = vmatpush1.msra.mxu0 %v245
    %755 = vmatprep.subr.mxu0 0.0
    %756 = vmatpush1.msra.mxu0 %v244
    %757 = vmatprep.subr.mxu0 0.0
    %758 = vmatpush1.msra.mxu0 %v243
    %759 = vmatprep.subr.mxu0 0.0
    %760 = vmatpush1.msra.mxu0 %v242
    %761 = vmatprep.subr.mxu0 0.0
    %762 = vmatpush1.msra.mxu0 %v241
    %763 = vmatprep.subr.mxu0 0.0
    %764 = vmatpush1.msra.mxu0 %v240
    %765 = vmatprep.subr.mxu0 0.0
    %766 = vmatpush1.msra.mxu0 %v239
    %767 = vmatprep.subr.mxu0 0.0
    %768 = vmatpush1.msra.mxu0 %v238
    %769 = vmatprep.subr.mxu0 0.0
    %770 = vmatpush1.msra.mxu0 %v237
    %771 = vmatprep.subr.mxu0 0.0
    %772 = vmatpush1.msra.mxu0 %v236
    %773 = vmatprep.subr.mxu0 0.0
    %774 = vmatpush1.msra.mxu0 %v235
    %775 = vmatprep.subr.mxu0 0.0
    %776 = vmatpush1.msra.mxu0 %v234
    %777 = vmatprep.subr.mxu0 0.0
    %778 = vmatpush1.msra.mxu0 %v233
    %779 = vmatprep.subr.mxu0 0.0
    %780 = vmatpush1.msra.mxu0 %v232
    %781 = vmatprep.subr.mxu0 0.0
    %782 = vmatpush1.msra.mxu0 %v231
    %783 = vmatprep.subr.mxu0 0.0
    %784 = vmatpush1.msra.mxu0 %v230
    %785 = vmatprep.subr.mxu0 0.0
    %786 = vmatpush2.msra.mxu0 %v261
    %787 = vmatprep.subr.mxu0 0.0
    %788 = vmatpush2.msra.mxu0 %v260
    %789 = vmatprep.subr.mxu0 0.0
    %790 = vmatpush2.msra.mxu0 %v259
    %791 = vmatprep.subr.mxu0 0.0
    %792 = vmatpush2.msra.mxu0 %v258
    %793 = vmatprep.subr.mxu0 0.0
    %794 = vmatpush2.msra.mxu0 %v257
    %795 = vmatprep.subr.mxu0 0.0
    %796 = vmatpush2.msra.mxu0 %v256
    %797 = vmatprep.subr.mxu0 0.0
    %798 = vmatpush2.msra.mxu0 %v255
    %799 = vmatprep.subr.mxu0 0.0
    %800 = vmatpush2.msra.mxu0 %v254
    %801 = vmatprep.subr.mxu0 0.0
    %802 = vmatpush2.msra.mxu0 %v253
    %803 = vmatprep.subr.mxu0 0.0
    %804 = vmatpush2.msra.mxu0 %v252
    %805 = vmatprep.subr.mxu0 0.0
    %806 = vmatpush2.msra.mxu0 %v251
    %807 = vmatprep.subr.mxu0 0.0
    %808 = vmatpush2.msra.mxu0 %v250
    %809 = vmatprep.subr.mxu0 0.0
    %810 = vmatpush2.msra.mxu0 %v249
    %811 = vmatprep.subr.mxu0 0.0
    %812 = vmatpush2.msra.mxu0 %v248
    %813 = vmatprep.subr.mxu0 0.0
    %814 = vmatpush2.msra.mxu0 %v247
    %815 = vmatprep.subr.mxu0 0.0
    %816 = vmatpush2.msra.mxu0 %v246
    %817 = vmatprep.mubr.f32.mxu0 %v744
    %818 = vmatmul.mubr.f32.gmra.mxu0 %v743
    %v819 = vpop.f32.mrf.mxu0
    %v820 = vadd.f32 %v751, %v819
    %v821 = vpop.f32.mrf.mxu0
    %822 = vdwg.mxu0
    %823 = vmatprep.subr.mxu0 0.0
    %824 = vmatpush1.msra.mxu0 %v277
    %825 = vmatprep.subr.mxu0 0.0
    %826 = vmatpush1.msra.mxu0 %v276
    %827 = vmatprep.subr.mxu0 0.0
    %828 = vmatpush1.msra.mxu0 %v275
    %829 = vmatprep.subr.mxu0 0.0
    %830 = vmatpush1.msra.mxu0 %v274
    %831 = vmatprep.subr.mxu0 0.0
    %832 = vmatpush1.msra.mxu0 %v273
    %833 = vmatprep.subr.mxu0 0.0
    %834 = vmatpush1.msra.mxu0 %v272
    %835 = vmatprep.subr.mxu0 0.0
    %836 = vmatpush1.msra.mxu0 %v271
    %837 = vmatprep.subr.mxu0 0.0
    %838 = vmatpush1.msra.mxu0 %v270
    %839 = vmatprep.subr.mxu0 0.0
    %840 = vmatpush1.msra.mxu0 %v269
    %841 = vmatprep.subr.mxu0 0.0
    %842 = vmatpush1.msra.mxu0 %v268
    %843 = vmatprep.subr.mxu0 0.0
    %844 = vmatpush1.msra.mxu0 %v267
    %845 = vmatprep.subr.mxu0 0.0
    %846 = vmatpush1.msra.mxu0 %v266
    %847 = vmatprep.subr.mxu0 0.0
    %848 = vmatpush1.msra.mxu0 %v265
    %849 = vmatprep.subr.mxu0 0.0
    %850 = vmatpush1.msra.mxu0 %v264
    %851 = vmatprep.subr.mxu0 0.0
    %852 = vmatpush1.msra.mxu0 %v263
    %853 = vmatprep.subr.mxu0 0.0
    %854 = vmatpush1.msra.mxu0 %v262
    %855 = vmatprep.subr.mxu0 0.0
    %856 = vmatpush2.msra.mxu0 0.0
    %857 = vmatprep.subr.mxu0 0.0
    %858 = vmatpush2.msra.mxu0 0.0
    %859 = vmatprep.subr.mxu0 0.0
    %860 = vmatpush2.msra.mxu0 0.0
    %861 = vmatprep.subr.mxu0 0.0
    %862 = vmatpush2.msra.mxu0 0.0
    %863 = vmatprep.subr.mxu0 0.0
    %864 = vmatpush2.msra.mxu0 0.0
    %865 = vmatprep.subr.mxu0 0.0
    %866 = vmatpush2.msra.mxu0 0.0
    %867 = vmatprep.subr.mxu0 0.0
    %868 = vmatpush2.msra.mxu0 0.0
    %869 = vmatprep.subr.mxu0 0.0
    %870 = vmatpush2.msra.mxu0 0.0
    %871 = vmatprep.subr.mxu0 0.0
    %872 = vmatpush2.msra.mxu0 0.0
    %873 = vmatprep.subr.mxu0 0.0
    %874 = vmatpush2.msra.mxu0 0.0
    %875 = vmatprep.subr.mxu0 0.0
    %876 = vmatpush2.msra.mxu0 0.0
    %877 = vmatprep.subr.mxu0 0.0
    %878 = vmatpush2.msra.mxu0 0.0
    %879 = vmatprep.subr.mxu0 0.0
    %880 = vmatpush2.msra.mxu0 0.0
    %881 = vmatprep.subr.mxu0 0.0
    %882 = vmatpush2.msra.mxu0 0.0
    %883 = vmatprep.subr.mxu0 0.0
    %884 = vmatpush2.msra.mxu0 0.0
    %885 = vmatprep.subr.mxu0 0.0
    %886 = vmatpush2.msra.mxu0 0.0
    %887 = vmatprep.mubr.f32.mxu0 0.0
    %888 = vmatmul.mubr.f32.gmra.mxu0 %v745
    %v889 = vpop.f32.mrf.mxu0
    %v890 = vadd.f32 %v820, %v889
    %v891 = vpop.f32.mrf.mxu0
    %892 = vdwg.mxu0
    %893 = vst [vmem:[#allocation10] sm:$0x3] %v890
    // Predicated region
    $region46: #{tpu_custom_call.1} parent=1 // pred_check
      _
    $region47: #{tpu_custom_call.1} parent=1 // pred_check_branch
      %895 = sbr.rel (0) target = $region49
    $region48: #{tpu_custom_call.1} parent=1 // pred_region
      %s897 = ssub.s32 32, 32
      %898 = vsyncadd [#allocation4], %s897
      %s900 = sshll.u32 [#allocation10], 4
      %s901 = int_to_ptr.vmem [resolvable:$true] %s900
      %903 = dma.vmem_to_hbm [thread:$0]  %s901, 32, %s7, [#allocation4]
    $region49: #{tpu_custom_call.1} parent=1 // pred_fallthru
      _
    // Predicated region
    $region50: #{tpu_custom_call.1} parent=1 // pred_check
      _
    $region51: #{tpu_custom_call.1} parent=1 // pred_check_branch
      %905 = sbr.rel (0) target = $region53
    $region52: #{tpu_custom_call.1} parent=1 // pred_region
      %906 = dma.done [#allocation4], 32
    $region53: #{tpu_custom_call.1} parent=1 // pred_fallthru
      _
    %907 = vsyncpa [#allocation3], 1
    %908 = vsyncpa [#allocation6], 1
    %909 = vsyncpa [#allocation9], 1
    %910 = vsyncpa [#allocation4], 1

</llo_original>
